<compile_context>
chip_gen: v7x
topology: tpu7x:2x2x1
jax: 0.10.0
libtpu: 0.0.40
codegen_flags: <defaults>
</compile_context>

<pallas_src>
import functools

import jax
import jax.numpy as jnp
from jax.experimental import pallas as pl
from jax.experimental.pallas import tpu as pltpu

HIDDEN = 200          # hidden_layer_sizes[0] == hidden_layer_sizes[-1]
IN_FEATURES = 4
N_MLPS = 3            # theta, phi, psi
N_OUT = 3
H_STACK = N_MLPS * HIDDEN   # 600


def _separate_mlp_kernel(x_ref, w1_ref, b1_ref, w2_ref, b2_ref, o_ref):
    """One grid step processes a (TN, 4) tile of rows for all three MLPs.

    Shapes seen by the kernel:
      x_ref : (TN, 4)
      w1_ref: (4, 600)      b1_ref: (1, 600)      (three W1 stacked on lanes)
      w2_ref: (600, 3)      b2_ref: (1, 3)        (block-diagonal W2)
      o_ref : (TN, 3)
    """
    x = x_ref[...]                                                     # (TN, 4)
    # Fused first layers of the 3 MLPs: one MXU matmul.
    z = jnp.dot(x, w1_ref[...], preferred_element_type=jnp.float32)   # (TN, 600)
    z = z + b1_ref[...]
    # sigmoid(z) == 0.5 * (tanh(0.5 * z) + 1): single EUP transcendental.
    z = 0.5 * (jnp.tanh(0.5 * z) + 1.0)
    # TODO(synk): nn.Dropout is identity at inference; training-mode dropout
    # (random masking / scaling) is not reproduced here.
    # Fused second layers + concat: block-diagonal matmul writes (TN, 3) directly.
    y = jnp.dot(z, w2_ref[...], preferred_element_type=jnp.float32)   # (TN, 3)
    o_ref[...] = y + b2_ref[...]


def _round_up(n, m):
    return (n + m - 1) // m * m


@functools.partial(jax.jit, static_argnames=("tile_n",))
def separate_mlp_forward(x, w1, b1, w2, b2, *, tile_n=1024):
    """x: (B, S, 4) f32. Params are per-MLP stacks (see init_params).

    Returns (B, S, 3) f32 = concat of the three MLP outputs on dim=2.
    """
    assert tile_n % 8 == 0, "tile_n must be a multiple of 8 (sublane constraint)"
    B, S, F = x.shape
    assert F == IN_FEATURES
    N = B * S
    x2 = x.reshape(N, F)

    # ---- Fuse parameters (tiny ops, folded by XLA outside the kernel) ----
    # W1: (3, 4, H) -> (4, 3H);  b1: (3, 1, H) -> (1, 3H)
    w1f = jnp.transpose(w1, (1, 0, 2)).reshape(IN_FEATURES, H_STACK)
    b1f = jnp.transpose(b1, (1, 0, 2)).reshape(1, H_STACK)
    # W2 (stored transposed per-MLP as (3, 1, H)) -> block-diagonal (3H, 3)
    w2_bd = jnp.zeros((H_STACK, N_OUT), dtype=jnp.float32)
    for m in range(N_MLPS):
        w2_bd = w2_bd.at[m * HIDDEN:(m + 1) * HIDDEN, m].set(w2[m, 0])
    b2f = b2.reshape(1, N_OUT)

    # ---- Tiling: big tiles for real workloads, clamp for tiny inputs ----
    tile_eff = min(tile_n, _round_up(N, 8))
    n_pad = (-N) % tile_eff
    if n_pad:
        x2 = jnp.pad(x2, ((0, n_pad), (0, 0)))
    n_rows = x2.shape[0]
    grid = (n_rows // tile_eff,)

    out = pl.pallas_call(
        _separate_mlp_kernel,
        out_shape=jax.ShapeDtypeStruct((n_rows, N_OUT), jnp.float32),
        grid_spec=pltpu.PrefetchScalarGridSpec(
            num_scalar_prefetch=0,
            grid=grid,
            in_specs=[
                pl.BlockSpec((tile_eff, F), lambda i: (i, 0)),
                pl.BlockSpec((IN_FEATURES, H_STACK), lambda i: (0, 0)),
                pl.BlockSpec((1, H_STACK), lambda i: (0, 0)),
                pl.BlockSpec((H_STACK, N_OUT), lambda i: (0, 0)),
                pl.BlockSpec((1, N_OUT), lambda i: (0, 0)),
            ],
            out_specs=pl.BlockSpec((tile_eff, N_OUT), lambda i: (i, 0)),
        ),
        compiler_params=pltpu.CompilerParams(
            dimension_semantics=("parallel",),
            # Plenty for tile_n up to ~4096 (activation (TN,640)f32 + double-
            # buffered x/out); safe on v5e/v6e/v7x scoped-VMEM budgets.
            vmem_limit_bytes=32 * 1024 * 1024,
        ),
    )(x2, w1f, b1f, w2_bd, b2f)

    return out[:N].reshape(B, S, N_OUT)


def init_params(key):
    """Deterministic params for the 3 MLPs (PyTorch Linear-style uniform init)."""
    ks = jax.random.split(key, 4 * N_MLPS)
    bound1 = 1.0 / jnp.sqrt(IN_FEATURES)
    bound2 = 1.0 / jnp.sqrt(HIDDEN)
    w1 = jnp.stack([
        jax.random.uniform(ks[4 * m + 0], (IN_FEATURES, HIDDEN),
                           minval=-bound1, maxval=bound1, dtype=jnp.float32)
        for m in range(N_MLPS)])                       # (3, 4, H)
    b1 = jnp.stack([
        jax.random.uniform(ks[4 * m + 1], (1, HIDDEN),
                           minval=-bound1, maxval=bound1, dtype=jnp.float32)
        for m in range(N_MLPS)])                       # (3, 1, H)
    w2 = jnp.stack([
        jax.random.uniform(ks[4 * m + 2], (1, HIDDEN),   # stored as (1, H) = W2^T
                           minval=-bound2, maxval=bound2, dtype=jnp.float32)
        for m in range(N_MLPS)])                       # (3, 1, H)
    b2 = jnp.stack([
        jax.random.uniform(ks[4 * m + 3], (1, 1),
                           minval=-bound2, maxval=bound2, dtype=jnp.float32)
        for m in range(N_MLPS)])                       # (3, 1, 1)
    return w1, b1, w2, b2


def reference_forward(x, w1, b1, w2, b2):
    """Pure-JAX reference mirroring the PyTorch forward (eval mode)."""
    outs = []
    for m in range(N_MLPS):
        z = jax.nn.sigmoid(x @ w1[m] + b1[m][0])           # (B, S, H)
        y = z @ w2[m][0][:, None] + b2[m][0]               # (B, S, 1)
        outs.append(y)
    return jnp.concatenate(outs, axis=2)                   # (B, S, 3)


if __name__ == "__main__":
    key = jax.random.PRNGKey(0)
    k_param, k_x = jax.random.split(key)

    B, S = 2, 8
    x = jax.random.normal(k_x, (B, S, IN_FEATURES), dtype=jnp.float32)
    w1, b1, w2, b2 = init_params(k_param)

    out = separate_mlp_forward(x, w1, b1, w2, b2)
    out = jax.block_until_ready(out)

    ref = reference_forward(x, w1, b1, w2, b2)
    assert out.shape == (B, S, N_OUT)
    assert jnp.allclose(out, ref, atol=1e-5, rtol=1e-5), "mismatch vs reference"

    print("KERNEL_OK")
</pallas_src>

<mosaic_0001>
module attributes {stable_mosaic.version = 11 : i64} {
  func.func @_separate_mlp_kernel(%arg0: i32, %arg1: memref<16x4xf32, #tpu.memory_space<vmem>>, %arg2: memref<4x600xf32, #tpu.memory_space<vmem>>, %arg3: memref<1x600xf32, #tpu.memory_space<vmem>>, %arg4: memref<600x3xf32, #tpu.memory_space<vmem>>, %arg5: memref<1x3xf32, #tpu.memory_space<vmem>>, %arg6: memref<16x3xf32, #tpu.memory_space<vmem>>) attributes {dimension_semantics = [#tpu.dimension_semantics<parallel>], iteration_bounds = array<i64: 1>, scalar_prefetch = 0 : i64, scratch_operands = 0 : i64, tpu.core_type = #tpu.core_type<tc>, window_params = [{transform_indices = @transform_0, window_bounds = array<i64: 16, 4>}, {pipeline_mode = #tpu.pipeline_mode<synchronous>, transform_indices = @transform_1, window_bounds = array<i64: 4, 600>}, {pipeline_mode = #tpu.pipeline_mode<synchronous>, transform_indices = @transform_2, window_bounds = array<i64: 1, 600>}, {pipeline_mode = #tpu.pipeline_mode<synchronous>, transform_indices = @transform_3, window_bounds = array<i64: 600, 3>}, {pipeline_mode = #tpu.pipeline_mode<synchronous>, transform_indices = @transform_4, window_bounds = array<i64: 1, 3>}, {transform_indices = @transform_5, window_bounds = array<i64: 16, 3>}]} {
    %c0 = arith.constant 0 : index
    %c0_0 = arith.constant 0 : index
    %0 = vector.load %arg1[%c0, %c0_0] : memref<16x4xf32, #tpu.memory_space<vmem>>, vector<16x4xf32>
    %c0_1 = arith.constant 0 : index
    %c0_2 = arith.constant 0 : index
    %1 = vector.load %arg2[%c0_1, %c0_2] : memref<4x600xf32, #tpu.memory_space<vmem>>, vector<4x600xf32>
    %cst = arith.constant dense<0.000000e+00> : vector<16x600xf32>
    %2 = tpu.matmul %0, %1, %cst {dimension_numbers = #tpu.dot_dimension_numbers<[1], [0], [0], [1], [0, 0, 1, 1], [], []>} : vector<16x4xf32>, vector<4x600xf32>, vector<16x600xf32> -> vector<16x600xf32>
    %c0_3 = arith.constant 0 : index
    %c0_4 = arith.constant 0 : index
    %3 = vector.load %arg3[%c0_3, %c0_4] : memref<1x600xf32, #tpu.memory_space<vmem>>, vector<1x600xf32>
    %4 = vector.broadcast %3 : vector<1x600xf32> to vector<16x600xf32>
    %5 = arith.addf %2, %4 : vector<16x600xf32>
    %cst_5 = arith.constant 5.000000e-01 : f32
    %6 = vector.broadcast %cst_5 : f32 to vector<16x600xf32>
    %7 = arith.mulf %6, %5 : vector<16x600xf32>
    %8 = math.tanh %7 : vector<16x600xf32>
    %cst_6 = arith.constant 1.000000e+00 : f32
    %9 = vector.broadcast %cst_6 : f32 to vector<16x600xf32>
    %10 = arith.addf %8, %9 : vector<16x600xf32>
    %cst_7 = arith.constant 5.000000e-01 : f32
    %11 = vector.broadcast %cst_7 : f32 to vector<16x600xf32>
    %12 = arith.mulf %11, %10 : vector<16x600xf32>
    %c0_8 = arith.constant 0 : index
    %c0_9 = arith.constant 0 : index
    %13 = vector.load %arg4[%c0_8, %c0_9] : memref<600x3xf32, #tpu.memory_space<vmem>>, vector<600x3xf32>
    %cst_10 = arith.constant dense<0.000000e+00> : vector<16x3xf32>
    %14 = tpu.matmul %12, %13, %cst_10 {dimension_numbers = #tpu.dot_dimension_numbers<[1], [0], [0], [1], [0, 0, 1, 1], [], []>} : vector<16x600xf32>, vector<600x3xf32>, vector<16x3xf32> -> vector<16x3xf32>
    %c0_11 = arith.constant 0 : index
    %c0_12 = arith.constant 0 : index
    %15 = vector.load %arg5[%c0_11, %c0_12] : memref<1x3xf32, #tpu.memory_space<vmem>>, vector<1x3xf32>
    %16 = vector.broadcast %15 : vector<1x3xf32> to vector<16x3xf32>
    %17 = arith.addf %14, %16 : vector<16x3xf32>
    %c0_13 = arith.constant 0 : index
    %c0_14 = arith.constant 0 : index
    %18 = vector.load %arg6[%c0_13, %c0_14] : memref<16x3xf32, #tpu.memory_space<vmem>>, vector<16x3xf32>
    tpu.vector_store %arg6[%c0_13, %c0_14], %17 {strides = array<i32>} : memref<16x3xf32, #tpu.memory_space<vmem>>, vector<16x3xf32>,
    return
  }
  func.func @transform_0(%arg0: i32) -> (i32, i32) {
    %c0_i32 = arith.constant 0 : i32
    %c0_i32_0 = arith.constant 0 : i32
    return %arg0, %c0_i32 : i32, i32
  }
  func.func @transform_1(%arg0: i32) -> (i32, i32) {
    %c0_i32 = arith.constant 0 : i32
    %c0_i32_0 = arith.constant 0 : i32
    %c0_i32_1 = arith.constant 0 : i32
    return %c0_i32, %c0_i32_0 : i32, i32
  }
  func.func @transform_2(%arg0: i32) -> (i32, i32) {
    %c0_i32 = arith.constant 0 : i32
    %c0_i32_0 = arith.constant 0 : i32
    %c0_i32_1 = arith.constant 0 : i32
    return %c0_i32, %c0_i32_0 : i32, i32
  }
  func.func @transform_3(%arg0: i32) -> (i32, i32) {
    %c0_i32 = arith.constant 0 : i32
    %c0_i32_0 = arith.constant 0 : i32
    %c0_i32_1 = arith.constant 0 : i32
    return %c0_i32, %c0_i32_0 : i32, i32
  }
  func.func @transform_4(%arg0: i32) -> (i32, i32) {
    %c0_i32 = arith.constant 0 : i32
    %c0_i32_0 = arith.constant 0 : i32
    %c0_i32_1 = arith.constant 0 : i32
    return %c0_i32, %c0_i32_0 : i32, i32
  }
  func.func @transform_5(%arg0: i32) -> (i32, i32) {
    %c0_i32 = arith.constant 0 : i32
    %c0_i32_0 = arith.constant 0 : i32
    return %arg0, %c0_i32 : i32, i32
  }
}

</mosaic_0001>

<llo_original>
// kernel: separate_mlp_forward.1
$region0: #{separate_mlp_forward.1}
  #allocation0 [shape = 'u32[]', space=smem, size = 0x4, offset = 0x4, fixed_abs, tag = 'smem constant byte address 0x4 - core index']
  #allocation1 [shape = 'u32[144,128]{1,0:T(1,128)}', space=vmem, size = 0x12000, scoped, tag = 'internal scratch']
  %s0 = inlined_call_operand.vmem [shape: f32[16,4], index: 0, kind: input, shape index: {}]
  %s1 = inlined_call_operand.vmem [shape: f32[4,600], index: 1, kind: input, shape index: {}]
  %s2 = inlined_call_operand.vmem [shape: f32[1,600], index: 2, kind: input, shape index: {}]
  %s3 = inlined_call_operand.vmem [shape: f32[600,3], index: 3, kind: input, shape index: {}]
  %s4 = inlined_call_operand.vmem [shape: f32[1,3], index: 4, kind: input, shape index: {}]
  %s5 = inlined_call_operand.vmem [shape: f32[16,3], index: 5, kind: output, shape index: {}]
  %s6 = sld [smem:[#allocation0]]
  $region30: #{separate_mlp_forward.1} parent=0
    _
  %s8 = ssub.s32 1, %s6
  %s9 = scalar_select 0, %s8, %s6
  // Predicated region
  $region2: #{separate_mlp_forward.1} parent=0 // pred_check
    _
  $region3: #{separate_mlp_forward.1} parent=0 // pred_check_branch
    %11 = sbr.rel (0) target = $region5
  $region4: #{separate_mlp_forward.1} parent=0 // pred_region
    _
  $region5: #{separate_mlp_forward.1} parent=0 // pred_fallthru
    _
  // Predicated region
  $region6: #{separate_mlp_forward.1} parent=0 // pred_check
    _
  $region7: #{separate_mlp_forward.1} parent=0 // pred_check_branch
    %13 = sbr.rel (0) target = $region9
  $region8: #{separate_mlp_forward.1} parent=0 // pred_region
    _
  $region9: #{separate_mlp_forward.1} parent=0 // pred_fallthru
    _
  // Predicated region
  $region10: #{separate_mlp_forward.1} parent=0 // pred_check
    _
  $region11: #{separate_mlp_forward.1} parent=0 // pred_check_branch
    %15 = sbr.rel (0) target = $region13
  $region12: #{separate_mlp_forward.1} parent=0 // pred_region
    _
  $region13: #{separate_mlp_forward.1} parent=0 // pred_fallthru
    _
  // Predicated region
  $region14: #{separate_mlp_forward.1} parent=0 // pred_check
    _
  $region15: #{separate_mlp_forward.1} parent=0 // pred_check_branch
    %17 = sbr.rel (0) target = $region17
  $region16: #{separate_mlp_forward.1} parent=0 // pred_region
    _
  $region17: #{separate_mlp_forward.1} parent=0 // pred_fallthru
    _
  // Predicated region
  $region18: #{separate_mlp_forward.1} parent=0 // pred_check
    _
  $region19: #{separate_mlp_forward.1} parent=0 // pred_check_branch
    %19 = sbr.rel (0) target = $region21
  $region20: #{separate_mlp_forward.1} parent=0 // pred_region
    _
  $region21: #{separate_mlp_forward.1} parent=0 // pred_fallthru
    _
  %v20 = vld [vmem:[%s0] sm:$0xff]
  %v21 = vld [vmem:[%s0 + $0x8] sm:$0xff]
  %v22 = vld [vmem:[%s1] sm:$0xff]
  %v23 = vld [vmem:[%s1 + $0x8] sm:$0xff]
  %v24 = vld [vmem:[%s1 + $0x10] sm:$0xf]
  %v25 = vld [vmem:[%s2] sm:$0x1f]
  %v27 = vlaneseq
  %v28 = vshrl.u32 %v27, 7
  %v29 = vsub.s32 0, %v28
  %v30 = vrot.slane %v25, %v29
  %v31 = vlaneseq
  %v32 = vshrl.u32 %v31, 7
  %v33 = vsub.s32 1, %v32
  %v34 = vrot.slane %v25, %v33
  %v35 = vlaneseq
  %v36 = vshrl.u32 %v35, 7
  %v37 = vsub.s32 2, %v36
  %v38 = vrot.slane %v25, %v37
  %v39 = vlaneseq
  %v40 = vshrl.u32 %v39, 7
  %v41 = vsub.s32 3, %v40
  %v42 = vrot.slane %v25, %v41
  %v43 = vlaneseq
  %v44 = vshrl.u32 %v43, 7
  %v45 = vsub.s32 4, %v44
  %v46 = vrot.slane %v25, %v45
  %v55 = vcombine.high %v22, %v22
  %v56 = vcombine.high %v23, %v23
  %vm57 = vcmask 31744
  %v59 = vsel %vm57, %v20, 0
  %v62 = vsel %vm57, %v21, 0
  %vm64 = vcmask 1043456
  %v65 = vsel %vm64, %v22, 0
  %v67 = vsel %vm64, %v55, 0
  %v69 = vsel %vm64, %v23, 0
  %v71 = vsel %vm64, %v56, 0
  %v73 = vsel %vm64, %v24, 0
  %75 = vmatprep.subr.mxu0 %v67
  %76 = vmatpush1.msra.mxu0 %v65
  %77 = vmatprep.subr.mxu0 0.0
  %78 = vmatpush1.msra.mxu0 0.0
  %79 = vmatprep.subr.mxu0 0.0
  %80 = vmatpush1.msra.mxu0 0.0
  %81 = vmatprep.subr.mxu0 0.0
  %82 = vmatpush1.msra.mxu0 0.0
  %83 = vmatprep.subr.mxu0 0.0
  %84 = vmatpush1.msra.mxu0 0.0
  %85 = vmatprep.subr.mxu0 0.0
  %86 = vmatpush1.msra.mxu0 0.0
  %87 = vmatprep.subr.mxu0 0.0
  %88 = vmatpush1.msra.mxu0 0.0
  %89 = vmatprep.subr.mxu0 0.0
  %90 = vmatpush1.msra.mxu0 0.0
  %91 = vmatprep.subr.mxu0 0.0
  %92 = vmatpush1.msra.mxu0 0.0
  %93 = vmatprep.subr.mxu0 0.0
  %94 = vmatpush1.msra.mxu0 0.0
  %95 = vmatprep.subr.mxu0 0.0
  %96 = vmatpush1.msra.mxu0 0.0
  %97 = vmatprep.subr.mxu0 0.0
  %98 = vmatpush1.msra.mxu0 0.0
  %99 = vmatprep.subr.mxu0 0.0
  %100 = vmatpush1.msra.mxu0 0.0
  %101 = vmatprep.subr.mxu0 0.0
  %102 = vmatpush1.msra.mxu0 0.0
  %103 = vmatprep.subr.mxu0 0.0
  %104 = vmatpush1.msra.mxu0 0.0
  %105 = vmatprep.subr.mxu0 0.0
  %106 = vmatpush1.msra.mxu0 0.0
  %107 = vmatprep.subr.mxu0 0.0
  %108 = vmatpush1.msra.mxu0 0.0
  %109 = vmatprep.subr.mxu0 0.0
  %110 = vmatpush1.msra.mxu0 0.0
  %111 = vmatprep.subr.mxu0 0.0
  %112 = vmatpush1.msra.mxu0 0.0
  %113 = vmatprep.subr.mxu0 0.0
  %114 = vmatpush1.msra.mxu0 0.0
  %115 = vmatprep.subr.mxu0 0.0
  %116 = vmatpush1.msra.mxu0 0.0
  %117 = vmatprep.subr.mxu0 0.0
  %118 = vmatpush1.msra.mxu0 0.0
  %119 = vmatprep.subr.mxu0 0.0
  %120 = vmatpush1.msra.mxu0 0.0
  %121 = vmatprep.subr.mxu0 0.0
  %122 = vmatpush1.msra.mxu0 0.0
  %123 = vmatprep.subr.mxu0 0.0
  %124 = vmatpush1.msra.mxu0 0.0
  %125 = vmatprep.subr.mxu0 0.0
  %126 = vmatpush1.msra.mxu0 0.0
  %127 = vmatprep.subr.mxu0 0.0
  %128 = vmatpush1.msra.mxu0 0.0
  %129 = vmatprep.subr.mxu0 0.0
  %130 = vmatpush1.msra.mxu0 0.0
  %131 = vmatprep.subr.mxu0 0.0
  %132 = vmatpush1.msra.mxu0 0.0
  %133 = vmatprep.subr.mxu0 0.0
  %134 = vmatpush1.msra.mxu0 0.0
  %135 = vmatprep.subr.mxu0 0.0
  %136 = vmatpush1.msra.mxu0 0.0
  %137 = vmatprep.subr.mxu0 0.0
  %138 = vmatpush1.msra.mxu0 0.0
  %139 = vmatprep.mubr.f32.mxu0 0.0
  %140 = vmatmul.mubr.f32.gmra.mrb[0].mxu0 %v59
  %v141 = vpop.f32.mrb[0].mxu0
  %v142 = vadd.f32 %v30, %v141
  %v143 = vpop.f32.mrb[0].mxu0
  %v144 = vadd.f32 %v34, %v143
  %145 = vmatprep.mubr.f32.mxu0 0.0
  %146 = vmatmul.mubr.f32.gmra.mrb[0].mxu0 %v62
  %v147 = vpop.f32.mrb[0].mxu0
  %v148 = vadd.f32 %v30, %v147
  %v149 = vpop.f32.mrb[0].mxu0
  %v150 = vadd.f32 %v34, %v149
  %151 = vdwg.mxu0
  %152 = vmatprep.subr.mxu0 %v71
  %153 = vmatpush1.msra.mxu0 %v69
  %154 = vmatprep.subr.mxu0 0.0
  %155 = vmatpush1.msra.mxu0 0.0
  %156 = vmatprep.subr.mxu0 0.0
  %157 = vmatpush1.msra.mxu0 0.0
  %158 = vmatprep.subr.mxu0 0.0
  %159 = vmatpush1.msra.mxu0 0.0
  %160 = vmatprep.subr.mxu0 0.0
  %161 = vmatpush1.msra.mxu0 0.0
  %162 = vmatprep.subr.mxu0 0.0
  %163 = vmatpush1.msra.mxu0 0.0
  %164 = vmatprep.subr.mxu0 0.0
  %165 = vmatpush1.msra.mxu0 0.0
  %166 = vmatprep.subr.mxu0 0.0
  %167 = vmatpush1.msra.mxu0 0.0
  %168 = vmatprep.subr.mxu0 0.0
  %169 = vmatpush1.msra.mxu0 0.0
  %170 = vmatprep.subr.mxu0 0.0
  %171 = vmatpush1.msra.mxu0 0.0
  %172 = vmatprep.subr.mxu0 0.0
  %173 = vmatpush1.msra.mxu0 0.0
  %174 = vmatprep.subr.mxu0 0.0
  %175 = vmatpush1.msra.mxu0 0.0
  %176 = vmatprep.subr.mxu0 0.0
  %177 = vmatpush1.msra.mxu0 0.0
  %178 = vmatprep.subr.mxu0 0.0
  %179 = vmatpush1.msra.mxu0 0.0
  %180 = vmatprep.subr.mxu0 0.0
  %181 = vmatpush1.msra.mxu0 0.0
  %182 = vmatprep.subr.mxu0 0.0
  %183 = vmatpush1.msra.mxu0 0.0
  %184 = vmatprep.subr.mxu0 0.0
  %185 = vmatpush1.msra.mxu0 0.0
  %186 = vmatprep.subr.mxu0 0.0
  %187 = vmatpush1.msra.mxu0 0.0
  %188 = vmatprep.subr.mxu0 0.0
  %189 = vmatpush1.msra.mxu0 0.0
  %190 = vmatprep.subr.mxu0 0.0
  %191 = vmatpush1.msra.mxu0 0.0
  %192 = vmatprep.subr.mxu0 0.0
  %193 = vmatpush1.msra.mxu0 0.0
  %194 = vmatprep.subr.mxu0 0.0
  %195 = vmatpush1.msra.mxu0 0.0
  %196 = vmatprep.subr.mxu0 0.0
  %197 = vmatpush1.msra.mxu0 0.0
  %198 = vmatprep.subr.mxu0 0.0
  %199 = vmatpush1.msra.mxu0 0.0
  %200 = vmatprep.subr.mxu0 0.0
  %201 = vmatpush1.msra.mxu0 0.0
  %202 = vmatprep.subr.mxu0 0.0
  %203 = vmatpush1.msra.mxu0 0.0
  %204 = vmatprep.subr.mxu0 0.0
  %205 = vmatpush1.msra.mxu0 0.0
  %206 = vmatprep.subr.mxu0 0.0
  %207 = vmatpush1.msra.mxu0 0.0
  %208 = vmatprep.subr.mxu0 0.0
  %209 = vmatpush1.msra.mxu0 0.0
  %210 = vmatprep.subr.mxu0 0.0
  %211 = vmatpush1.msra.mxu0 0.0
  %212 = vmatprep.subr.mxu0 0.0
  %213 = vmatpush1.msra.mxu0 0.0
  %214 = vmatprep.subr.mxu0 0.0
  %215 = vmatpush1.msra.mxu0 0.0
  %216 = vmatprep.mubr.f32.mxu0 0.0
  %217 = vmatmul.mubr.f32.gmra.mrb[0].mxu0 %v59
  %v218 = vpop.f32.mrb[0].mxu0
  %v219 = vadd.f32 %v38, %v218
  %v220 = vpop.f32.mrb[0].mxu0
  %v221 = vadd.f32 %v42, %v220
  %222 = vmatprep.mubr.f32.mxu0 0.0
  %223 = vmatmul.mubr.f32.gmra.mrb[0].mxu0 %v62
  %v224 = vpop.f32.mrb[0].mxu0
  %v225 = vadd.f32 %v38, %v224
  %v226 = vpop.f32.mrb[0].mxu0
  %v227 = vadd.f32 %v42, %v226
  %228 = vdwg.mxu0
  %229 = vmatprep.subr.mxu0 0.0
  %230 = vmatpush1.msra.mxu0 %v73
  %231 = vmatprep.subr.mxu0 0.0
  %232 = vmatpush1.msra.mxu0 0.0
  %233 = vmatprep.subr.mxu0 0.0
  %234 = vmatpush1.msra.mxu0 0.0
  %235 = vmatprep.subr.mxu0 0.0
  %236 = vmatpush1.msra.mxu0 0.0
  %237 = vmatprep.subr.mxu0 0.0
  %238 = vmatpush1.msra.mxu0 0.0
  %239 = vmatprep.subr.mxu0 0.0
  %240 = vmatpush1.msra.mxu0 0.0
  %241 = vmatprep.subr.mxu0 0.0
  %242 = vmatpush1.msra.mxu0 0.0
  %243 = vmatprep.subr.mxu0 0.0
  %244 = vmatpush1.msra.mxu0 0.0
  %245 = vmatprep.subr.mxu0 0.0
  %246 = vmatpush1.msra.mxu0 0.0
  %247 = vmatprep.subr.mxu0 0.0
  %248 = vmatpush1.msra.mxu0 0.0
  %249 = vmatprep.subr.mxu0 0.0
  %250 = vmatpush1.msra.mxu0 0.0
  %251 = vmatprep.subr.mxu0 0.0
  %252 = vmatpush1.msra.mxu0 0.0
  %253 = vmatprep.subr.mxu0 0.0
  %254 = vmatpush1.msra.mxu0 0.0
  %255 = vmatprep.subr.mxu0 0.0
  %256 = vmatpush1.msra.mxu0 0.0
  %257 = vmatprep.subr.mxu0 0.0
  %258 = vmatpush1.msra.mxu0 0.0
  %259 = vmatprep.subr.mxu0 0.0
  %260 = vmatpush1.msra.mxu0 0.0
  %261 = vmatprep.subr.mxu0 0.0
  %262 = vmatpush1.msra.mxu0 0.0
  %263 = vmatprep.subr.mxu0 0.0
  %264 = vmatpush1.msra.mxu0 0.0
  %265 = vmatprep.subr.mxu0 0.0
  %266 = vmatpush1.msra.mxu0 0.0
  %267 = vmatprep.subr.mxu0 0.0
  %268 = vmatpush1.msra.mxu0 0.0
  %269 = vmatprep.subr.mxu0 0.0
  %270 = vmatpush1.msra.mxu0 0.0
  %271 = vmatprep.subr.mxu0 0.0
  %272 = vmatpush1.msra.mxu0 0.0
  %273 = vmatprep.subr.mxu0 0.0
  %274 = vmatpush1.msra.mxu0 0.0
  %275 = vmatprep.subr.mxu0 0.0
  %276 = vmatpush1.msra.mxu0 0.0
  %277 = vmatprep.subr.mxu0 0.0
  %278 = vmatpush1.msra.mxu0 0.0
  %279 = vmatprep.subr.mxu0 0.0
  %280 = vmatpush1.msra.mxu0 0.0
  %281 = vmatprep.subr.mxu0 0.0
  %282 = vmatpush1.msra.mxu0 0.0
  %283 = vmatprep.subr.mxu0 0.0
  %284 = vmatpush1.msra.mxu0 0.0
  %285 = vmatprep.subr.mxu0 0.0
  %286 = vmatpush1.msra.mxu0 0.0
  %287 = vmatprep.subr.mxu0 0.0
  %288 = vmatpush1.msra.mxu0 0.0
  %289 = vmatprep.subr.mxu0 0.0
  %290 = vmatpush1.msra.mxu0 0.0
  %291 = vmatprep.subr.mxu0 0.0
  %292 = vmatpush1.msra.mxu0 0.0
  %293 = vmatprep.mubr.f32.mxu0 0.0
  %294 = vmatmul.mubr.f32.gmra.mrb[0].mxu0 %v59
  %v295 = vpop.f32.mrb[0].mxu0
  %v296 = vadd.f32 %v46, %v295
  %v297 = vpop.f32.mrb[0].mxu0
  %298 = vmatprep.mubr.f32.mxu0 0.0
  %299 = vmatmul.mubr.f32.gmra.mrb[0].mxu0 %v62
  %v300 = vpop.f32.mrb[0].mxu0
  %v301 = vadd.f32 %v46, %v300
  %v302 = vpop.f32.mrb[0].mxu0
  %303 = vdwg.mxu0
  %v304 = vmul.f32 %v142, 0.5
  %v305 = vmul.f32 %v144, 0.5
  %v306 = vmul.f32 %v219, 0.5
  %v307 = vmul.f32 %v221, 0.5
  %v308 = vmul.f32 %v296, 0.5
  %v309 = vmul.f32 %v148, 0.5
  %v310 = vmul.f32 %v150, 0.5
  %v311 = vmul.f32 %v225, 0.5
  %v312 = vmul.f32 %v227, 0.5
  %v313 = vmul.f32 %v301, 0.5
  %v314 = vtanh.pop %v304
  %v315 = vtanh.pop %v305
  %v316 = vtanh.pop %v306
  %v317 = vtanh.pop %v307
  %v318 = vtanh.pop %v308
  %v319 = vtanh.pop %v309
  %v320 = vtanh.pop %v310
  %v321 = vtanh.pop %v311
  %v322 = vtanh.pop %v312
  %v323 = vtanh.pop %v313
  %v324 = vadd.f32 %v314, 1.0
  %v325 = vadd.f32 %v315, 1.0
  %v326 = vadd.f32 %v316, 1.0
  %v327 = vadd.f32 %v317, 1.0
  %v328 = vadd.f32 %v318, 1.0
  %v329 = vadd.f32 %v319, 1.0
  %v330 = vadd.f32 %v320, 1.0
  %v331 = vadd.f32 %v321, 1.0
  %v332 = vadd.f32 %v322, 1.0
  %v333 = vadd.f32 %v323, 1.0
  %v334 = vmul.f32 %v324, 0.5
  %v335 = vmul.f32 %v325, 0.5
  %v336 = vmul.f32 %v326, 0.5
  %v337 = vmul.f32 %v327, 0.5
  %v338 = vmul.f32 %v328, 0.5
  %v339 = vmul.f32 %v329, 0.5
  %v340 = vmul.f32 %v330, 0.5
  %v341 = vmul.f32 %v331, 0.5
  %v342 = vmul.f32 %v332, 0.5
  %v343 = vmul.f32 %v333, 0.5
  %v344 = vld [vmem:[%s3] sm:$0xff]
  %v345 = vld [vmem:[%s3 + $0x8] sm:$0xff]
  %v346 = vld [vmem:[%s3 + $0x10] sm:$0xff]
  %v347 = vld [vmem:[%s3 + $0x18] sm:$0xff]
  %v348 = vld [vmem:[%s3 + $0x20] sm:$0xff]
  %v349 = vld [vmem:[%s3 + $0x28] sm:$0xff]
  %v350 = vld [vmem:[%s3 + $0x30] sm:$0xff]
  %v351 = vld [vmem:[%s3 + $0x38] sm:$0xff]
  %v352 = vld [vmem:[%s3 + $0x40] sm:$0xff]
  %v353 = vld [vmem:[%s3 + $0x48] sm:$0xff]
  %v354 = vld [vmem:[%s3 + $0x50] sm:$0xff]
  %v355 = vld [vmem:[%s3 + $0x58] sm:$0xff]
  %v356 = vld [vmem:[%s3 + $0x60] sm:$0xff]
  %v357 = vld [vmem:[%s3 + $0x68] sm:$0xff]
  %v358 = vld [vmem:[%s3 + $0x70] sm:$0xff]
  %v359 = vld [vmem:[%s3 + $0x78] sm:$0xff]
  %v360 = vld [vmem:[%s3 + $0x80] sm:$0xff]
  %v361 = vld [vmem:[%s3 + $0x88] sm:$0xff]
  %v362 = vld [vmem:[%s3 + $0x90] sm:$0xff]
  %v363 = vld [vmem:[%s3 + $0x98] sm:$0xff]
  %v364 = vld [vmem:[%s3 + $0xa0] sm:$0xff]
  %v365 = vld [vmem:[%s3 + $0xa8] sm:$0xff]
  %v366 = vld [vmem:[%s3 + $0xb0] sm:$0xff]
  %v367 = vld [vmem:[%s3 + $0xb8] sm:$0xff]
  %v368 = vld [vmem:[%s3 + $0xc0] sm:$0xff]
  %v369 = vld [vmem:[%s3 + $0xc8] sm:$0xff]
  %v370 = vld [vmem:[%s3 + $0xd0] sm:$0xff]
  %v371 = vld [vmem:[%s3 + $0xd8] sm:$0xff]
  %v372 = vld [vmem:[%s3 + $0xe0] sm:$0xff]
  %v373 = vld [vmem:[%s3 + $0xe8] sm:$0xff]
  %v374 = vld [vmem:[%s3 + $0xf0] sm:$0xff]
  %v375 = vld [vmem:[%s3 + $0xf8] sm:$0xff]
  %v376 = vld [vmem:[%s3 + $0x100] sm:$0xff]
  %v377 = vld [vmem:[%s3 + $0x108] sm:$0xff]
  %v378 = vld [vmem:[%s3 + $0x110] sm:$0xff]
  %v379 = vld [vmem:[%s3 + $0x118] sm:$0xff]
  %v380 = vld [vmem:[%s3 + $0x120] sm:$0xff]
  %v381 = vld [vmem:[%s3 + $0x128] sm:$0xff]
  %v382 = vld [vmem:[%s3 + $0x130] sm:$0xff]
  %v383 = vld [vmem:[%s3 + $0x138] sm:$0xff]
  %v384 = vld [vmem:[%s3 + $0x140] sm:$0xff]
  %v385 = vld [vmem:[%s3 + $0x148] sm:$0xff]
  %v386 = vld [vmem:[%s3 + $0x150] sm:$0xff]
  %v387 = vld [vmem:[%s3 + $0x158] sm:$0xff]
  %v388 = vld [vmem:[%s3 + $0x160] sm:$0xff]
  %v389 = vld [vmem:[%s3 + $0x168] sm:$0xff]
  %v390 = vld [vmem:[%s3 + $0x170] sm:$0xff]
  %v391 = vld [vmem:[%s3 + $0x178] sm:$0xff]
  %v392 = vld [vmem:[%s3 + $0x180] sm:$0xff]
  %v393 = vld [vmem:[%s3 + $0x188] sm:$0xff]
  %v394 = vld [vmem:[%s3 + $0x190] sm:$0xff]
  %v395 = vld [vmem:[%s3 + $0x198] sm:$0xff]
  %v396 = vld [vmem:[%s3 + $0x1a0] sm:$0xff]
  %v397 = vld [vmem:[%s3 + $0x1a8] sm:$0xff]
  %v398 = vld [vmem:[%s3 + $0x1b0] sm:$0xff]
  %v399 = vld [vmem:[%s3 + $0x1b8] sm:$0xff]
  %v400 = vld [vmem:[%s3 + $0x1c0] sm:$0xff]
  %v401 = vld [vmem:[%s3 + $0x1c8] sm:$0xff]
  %v402 = vld [vmem:[%s3 + $0x1d0] sm:$0xff]
  %v403 = vld [vmem:[%s3 + $0x1d8] sm:$0xff]
  %v404 = vld [vmem:[%s3 + $0x1e0] sm:$0xff]
  %v405 = vld [vmem:[%s3 + $0x1e8] sm:$0xff]
  %v406 = vld [vmem:[%s3 + $0x1f0] sm:$0xff]
  %v407 = vld [vmem:[%s3 + $0x1f8] sm:$0xff]
  %v408 = vld [vmem:[%s3 + $0x200] sm:$0xff]
  %v409 = vld [vmem:[%s3 + $0x208] sm:$0xff]
  %v410 = vld [vmem:[%s3 + $0x210] sm:$0xff]
  %v411 = vld [vmem:[%s3 + $0x218] sm:$0xff]
  %v412 = vld [vmem:[%s3 + $0x220] sm:$0xff]
  %v413 = vld [vmem:[%s3 + $0x228] sm:$0xff]
  %v414 = vld [vmem:[%s3 + $0x230] sm:$0xff]
  %v415 = vld [vmem:[%s3 + $0x238] sm:$0xff]
  %v416 = vld [vmem:[%s3 + $0x240] sm:$0xff]
  %v417 = vld [vmem:[%s3 + $0x248] sm:$0xff]
  %v418 = vld [vmem:[%s3 + $0x250] sm:$0xff]
  %v419 = vld [vmem:[%s4] sm:$0x1]
  %v421 = vlaneseq
  %v422 = vshrl.u32 %v421, 7
  %v423 = vsub.s32 0, %v422
  %v424 = vrot.slane %v419, %v423
  %vm426 = vcmask 719872
  %v428 = vsel %vm426, %v338, 0
  %v431 = vsel %vm426, %v343, 0
  %433 = vmatprep.subr.mxu0 0.0
  %434 = vmatpush1.msra.mxu0 %v344
  %435 = vmatprep.subr.mxu0 0.0
  %436 = vmatpush1.msra.mxu0 %v345
  %437 = vmatprep.subr.mxu0 0.0
  %438 = vmatpush1.msra.mxu0 %v346
  %439 = vmatprep.subr.mxu0 0.0
  %440 = vmatpush1.msra.mxu0 %v347
  %441 = vmatprep.subr.mxu0 0.0
  %442 = vmatpush1.msra.mxu0 %v348
  %443 = vmatprep.subr.mxu0 0.0
  %444 = vmatpush1.msra.mxu0 %v349
  %445 = vmatprep.subr.mxu0 0.0
  %446 = vmatpush1.msra.mxu0 %v350
  %447 = vmatprep.subr.mxu0 0.0
  %448 = vmatpush1.msra.mxu0 %v351
  %449 = vmatprep.subr.mxu0 0.0
  %450 = vmatpush1.msra.mxu0 %v352
  %451 = vmatprep.subr.mxu0 0.0
  %452 = vmatpush1.msra.mxu0 %v353
  %453 = vmatprep.subr.mxu0 0.0
  %454 = vmatpush1.msra.mxu0 %v354
  %455 = vmatprep.subr.mxu0 0.0
  %456 = vmatpush1.msra.mxu0 %v355
  %457 = vmatprep.subr.mxu0 0.0
  %458 = vmatpush1.msra.mxu0 %v356
  %459 = vmatprep.subr.mxu0 0.0
  %460 = vmatpush1.msra.mxu0 %v357
  %461 = vmatprep.subr.mxu0 0.0
  %462 = vmatpush1.msra.mxu0 %v358
  %463 = vmatprep.subr.mxu0 0.0
  %464 = vmatpush1.msra.mxu0 %v359
  %465 = vmatprep.subr.mxu0 0.0
  %466 = vmatpush1.msra.mxu0 %v360
  %467 = vmatprep.subr.mxu0 0.0
  %468 = vmatpush1.msra.mxu0 %v361
  %469 = vmatprep.subr.mxu0 0.0
  %470 = vmatpush1.msra.mxu0 %v362
  %471 = vmatprep.subr.mxu0 0.0
  %472 = vmatpush1.msra.mxu0 %v363
  %473 = vmatprep.subr.mxu0 0.0
  %474 = vmatpush1.msra.mxu0 %v364
  %475 = vmatprep.subr.mxu0 0.0
  %476 = vmatpush1.msra.mxu0 %v365
  %477 = vmatprep.subr.mxu0 0.0
  %478 = vmatpush1.msra.mxu0 %v366
  %479 = vmatprep.subr.mxu0 0.0
  %480 = vmatpush1.msra.mxu0 %v367
  %481 = vmatprep.subr.mxu0 0.0
  %482 = vmatpush1.msra.mxu0 %v368
  %483 = vmatprep.subr.mxu0 0.0
  %484 = vmatpush1.msra.mxu0 %v369
  %485 = vmatprep.subr.mxu0 0.0
  %486 = vmatpush1.msra.mxu0 %v370
  %487 = vmatprep.subr.mxu0 0.0
  %488 = vmatpush1.msra.mxu0 %v371
  %489 = vmatprep.subr.mxu0 0.0
  %490 = vmatpush1.msra.mxu0 %v372
  %491 = vmatprep.subr.mxu0 0.0
  %492 = vmatpush1.msra.mxu0 %v373
  %493 = vmatprep.subr.mxu0 0.0
  %494 = vmatpush1.msra.mxu0 %v374
  %495 = vmatprep.subr.mxu0 0.0
  %496 = vmatpush1.msra.mxu0 %v375
  %497 = vmatprep.mubr.f32.mxu0 %v335
  %498 = vmatmul.mubr.f32.gmra.mrb[0].mxu0 %v334
  %v499 = vpop.f32.mrb[0].mxu0
  %v500 = vadd.f32 %v424, %v499
  %v501 = vpop.f32.mrb[0].mxu0
  %502 = vmatprep.mubr.f32.mxu0 %v340
  %503 = vmatmul.mubr.f32.gmra.mrb[0].mxu0 %v339
  %v504 = vpop.f32.mrb[0].mxu0
  %v505 = vadd.f32 %v424, %v504
  %v506 = vpop.f32.mrb[0].mxu0
  %507 = vdwg.mxu0
  %508 = vmatprep.subr.mxu0 0.0
  %509 = vmatpush1.msra.mxu0 %v376
  %510 = vmatprep.subr.mxu0 0.0
  %511 = vmatpush1.msra.mxu0 %v377
  %512 = vmatprep.subr.mxu0 0.0
  %513 = vmatpush1.msra.mxu0 %v378
  %514 = vmatprep.subr.mxu0 0.0
  %515 = vmatpush1.msra.mxu0 %v379
  %516 = vmatprep.subr.mxu0 0.0
  %517 = vmatpush1.msra.mxu0 %v380
  %518 = vmatprep.subr.mxu0 0.0
  %519 = vmatpush1.msra.mxu0 %v381
  %520 = vmatprep.subr.mxu0 0.0
  %521 = vmatpush1.msra.mxu0 %v382
  %522 = vmatprep.subr.mxu0 0.0
  %523 = vmatpush1.msra.mxu0 %v383
  %524 = vmatprep.subr.mxu0 0.0
  %525 = vmatpush1.msra.mxu0 %v384
  %526 = vmatprep.subr.mxu0 0.0
  %527 = vmatpush1.msra.mxu0 %v385
  %528 = vmatprep.subr.mxu0 0.0
  %529 = vmatpush1.msra.mxu0 %v386
  %530 = vmatprep.subr.mxu0 0.0
  %531 = vmatpush1.msra.mxu0 %v387
  %532 = vmatprep.subr.mxu0 0.0
  %533 = vmatpush1.msra.mxu0 %v388
  %534 = vmatprep.subr.mxu0 0.0
  %535 = vmatpush1.msra.mxu0 %v389
  %536 = vmatprep.subr.mxu0 0.0
  %537 = vmatpush1.msra.mxu0 %v390
  %538 = vmatprep.subr.mxu0 0.0
  %539 = vmatpush1.msra.mxu0 %v391
  %540 = vmatprep.subr.mxu0 0.0
  %541 = vmatpush1.msra.mxu0 %v392
  %542 = vmatprep.subr.mxu0 0.0
  %543 = vmatpush1.msra.mxu0 %v393
  %544 = vmatprep.subr.mxu0 0.0
  %545 = vmatpush1.msra.mxu0 %v394
  %546 = vmatprep.subr.mxu0 0.0
  %547 = vmatpush1.msra.mxu0 %v395
  %548 = vmatprep.subr.mxu0 0.0
  %549 = vmatpush1.msra.mxu0 %v396
  %550 = vmatprep.subr.mxu0 0.0
  %551 = vmatpush1.msra.mxu0 %v397
  %552 = vmatprep.subr.mxu0 0.0
  %553 = vmatpush1.msra.mxu0 %v398
  %554 = vmatprep.subr.mxu0 0.0
  %555 = vmatpush1.msra.mxu0 %v399
  %556 = vmatprep.subr.mxu0 0.0
  %557 = vmatpush1.msra.mxu0 %v400
  %558 = vmatprep.subr.mxu0 0.0
  %559 = vmatpush1.msra.mxu0 %v401
  %560 = vmatprep.subr.mxu0 0.0
  %561 = vmatpush1.msra.mxu0 %v402
  %562 = vmatprep.subr.mxu0 0.0
  %563 = vmatpush1.msra.mxu0 %v403
  %564 = vmatprep.subr.mxu0 0.0
  %565 = vmatpush1.msra.mxu0 %v404
  %566 = vmatprep.subr.mxu0 0.0
  %567 = vmatpush1.msra.mxu0 %v405
  %568 = vmatprep.subr.mxu0 0.0
  %569 = vmatpush1.msra.mxu0 %v406
  %570 = vmatprep.subr.mxu0 0.0
  %571 = vmatpush1.msra.mxu0 %v407
  %572 = vmatprep.mubr.f32.mxu0 %v337
  %573 = vmatmul.mubr.f32.gmra.mrb[0].mxu0 %v336
  %v574 = vpop.f32.mrb[0].mxu0
  %v575 = vadd.f32 %v500, %v574
  %v576 = vpop.f32.mrb[0].mxu0
  %577 = vmatprep.mubr.f32.mxu0 %v342
  %578 = vmatmul.mubr.f32.gmra.mrb[0].mxu0 %v341
  %v579 = vpop.f32.mrb[0].mxu0
  %v580 = vadd.f32 %v505, %v579
  %v581 = vpop.f32.mrb[0].mxu0
  %582 = vdwg.mxu0
  %583 = vmatprep.subr.mxu0 0.0
  %584 = vmatpush1.msra.mxu0 %v408
  %585 = vmatprep.subr.mxu0 0.0
  %586 = vmatpush1.msra.mxu0 %v409
  %587 = vmatprep.subr.mxu0 0.0
  %588 = vmatpush1.msra.mxu0 %v410
  %589 = vmatprep.subr.mxu0 0.0
  %590 = vmatpush1.msra.mxu0 %v411
  %591 = vmatprep.subr.mxu0 0.0
  %592 = vmatpush1.msra.mxu0 %v412
  %593 = vmatprep.subr.mxu0 0.0
  %594 = vmatpush1.msra.mxu0 %v413
  %595 = vmatprep.subr.mxu0 0.0
  %596 = vmatpush1.msra.mxu0 %v414
  %597 = vmatprep.subr.mxu0 0.0
  %598 = vmatpush1.msra.mxu0 %v415
  %599 = vmatprep.subr.mxu0 0.0
  %600 = vmatpush1.msra.mxu0 %v416
  %601 = vmatprep.subr.mxu0 0.0
  %602 = vmatpush1.msra.mxu0 %v417
  %603 = vmatprep.subr.mxu0 0.0
  %604 = vmatpush1.msra.mxu0 %v418
  %605 = vmatprep.subr.mxu0 0.0
  %606 = vmatpush1.msra.mxu0 0.0
  %607 = vmatprep.subr.mxu0 0.0
  %608 = vmatpush1.msra.mxu0 0.0
  %609 = vmatprep.subr.mxu0 0.0
  %610 = vmatpush1.msra.mxu0 0.0
  %611 = vmatprep.subr.mxu0 0.0
  %612 = vmatpush1.msra.mxu0 0.0
  %613 = vmatprep.subr.mxu0 0.0
  %614 = vmatpush1.msra.mxu0 0.0
  %615 = vmatprep.subr.mxu0 0.0
  %616 = vmatpush1.msra.mxu0 0.0
  %617 = vmatprep.subr.mxu0 0.0
  %618 = vmatpush1.msra.mxu0 0.0
  %619 = vmatprep.subr.mxu0 0.0
  %620 = vmatpush1.msra.mxu0 0.0
  %621 = vmatprep.subr.mxu0 0.0
  %622 = vmatpush1.msra.mxu0 0.0
  %623 = vmatprep.subr.mxu0 0.0
  %624 = vmatpush1.msra.mxu0 0.0
  %625 = vmatprep.subr.mxu0 0.0
  %626 = vmatpush1.msra.mxu0 0.0
  %627 = vmatprep.subr.mxu0 0.0
  %628 = vmatpush1.msra.mxu0 0.0
  %629 = vmatprep.subr.mxu0 0.0
  %630 = vmatpush1.msra.mxu0 0.0
  %631 = vmatprep.subr.mxu0 0.0
  %632 = vmatpush1.msra.mxu0 0.0
  %633 = vmatprep.subr.mxu0 0.0
  %634 = vmatpush1.msra.mxu0 0.0
  %635 = vmatprep.subr.mxu0 0.0
  %636 = vmatpush1.msra.mxu0 0.0
  %637 = vmatprep.subr.mxu0 0.0
  %638 = vmatpush1.msra.mxu0 0.0
  %639 = vmatprep.subr.mxu0 0.0
  %640 = vmatpush1.msra.mxu0 0.0
  %641 = vmatprep.subr.mxu0 0.0
  %642 = vmatpush1.msra.mxu0 0.0
  %643 = vmatprep.subr.mxu0 0.0
  %644 = vmatpush1.msra.mxu0 0.0
  %645 = vmatprep.subr.mxu0 0.0
  %646 = vmatpush1.msra.mxu0 0.0
  %647 = vmatprep.mubr.f32.mxu0 0.0
  %648 = vmatmul.mubr.f32.gmra.mrb[0].mxu0 %v428
  %v649 = vpop.f32.mrb[0].mxu0
  %v650 = vadd.f32 %v575, %v649
  %v651 = vpop.f32.mrb[0].mxu0
  %652 = vmatprep.mubr.f32.mxu0 0.0
  %653 = vmatmul.mubr.f32.gmra.mrb[0].mxu0 %v431
  %v654 = vpop.f32.mrb[0].mxu0
  %v655 = vadd.f32 %v580, %v654
  %v656 = vpop.f32.mrb[0].mxu0
  %657 = vdwg.mxu0
  %vm658 = vcmask 23552
  %659 = vst.msk [vmem:[%s5] sm:$0xff] %vm658, %v650
  %660 = vst.msk [vmem:[%s5 + $0x8] sm:$0xff] %vm658, %v655
  // Predicated region
  $region22: #{separate_mlp_forward.1} parent=0 // pred_check
    _
  $region23: #{separate_mlp_forward.1} parent=0 // pred_check_branch
    %662 = sbr.rel (0) target = $region25
  $region24: #{separate_mlp_forward.1} parent=0 // pred_region
    _
  $region25: #{separate_mlp_forward.1} parent=0 // pred_fallthru
    _
  // Predicated region
  $region26: #{separate_mlp_forward.1} parent=0 // pred_check
    _
  $region27: #{separate_mlp_forward.1} parent=0 // pred_check_branch
    %664 = sbr.rel (0) target = $region29
  $region28: #{separate_mlp_forward.1} parent=0 // pred_region
    _
  $region29: #{separate_mlp_forward.1} parent=0 // pred_fallthru
    _

</llo_original>
